<compile_context>
chip_gen: v6e
topology: v6e:2x2x1
jax: 0.10.0
libtpu: 0.0.40
codegen_flags: <defaults>
</compile_context>

<pallas_src>
import jax
import jax.numpy as jnp
from jax.experimental import pallas as pl
from jax.experimental.pallas import tpu as pltpu

_MiB = 1024 * 1024


def _cdiv(a, b):
    return (a + b - 1) // b


def _round_up(a, b):
    return _cdiv(a, b) * b


def _vmem_budget_and_limit():
    """Generation-aware per-step VMEM budget and scoped vmem_limit_bytes."""
    try:
        cap = int(pltpu.get_tpu_info().vmem_capacity_bytes)
    except Exception:
        cap = 64 * _MiB  # conservative (v7x per-TC) fallback
    budget = min(int(0.5 * cap), 48 * _MiB)
    limit = max(32 * _MiB, min(int(0.8 * cap), 100 * _MiB))
    return budget, limit


def _estimate_vmem_bytes(tile_l, widths, in_bytes, out_bytes):
    """Per-grid-step VMEM: double-buffered I/O + live acts + resident params."""
    io = 2 * widths[0] * tile_l * in_bytes + 2 * widths[-1] * tile_l * out_bytes
    # Live activations: compute-dtype input of a layer + its f32 dot result.
    act = max(widths[i] * in_bytes + widths[i + 1] * 4
              for i in range(len(widths) - 1)) * tile_l
    # Resident, single-buffered weights/biases.
    params = sum(widths[i] * widths[i + 1] * in_bytes + widths[i + 1] * 4
                 for i in range(len(widths) - 1))
    return io + act + params


def _choose_tile_l(n_rows, l_pad, widths, in_bytes, out_bytes, budget):
    """Pick a lane tile: divisor of l_pad, as big as the VMEM budget allows."""
    if l_pad <= 256 or l_pad % 128 != 0:
        return l_pad  # single full-L block (exempt from the (8,128) rule)

    def est(t):
        return _estimate_vmem_bytes(t, widths, in_bytes, out_bytes)

    units = l_pad // 128
    cands = sorted(d * 128 for d in range(1, units + 1) if units % d == 0)
    fits = [c for c in cands if est(c) <= budget] or [cands[0]]
    # Prefer a multiple of 512 (full MXU passes on v6e/v7x), else the largest.
    tile = max([c for c in fits if c % 512 == 0], default=max(fits))

    def steps_of(c):
        return n_rows * (l_pad // c)

    total = steps_of(tile)
    # v7x megacore: want >=2 total parallel steps and an even split, but never
    # shrink below 1024 lanes just for evenness (keeps 1-TC chips overhead-free).
    if total < 2 or total % 2:
        good = [c for c in fits if steps_of(c) >= 2 and steps_of(c) % 2 == 0]
        if not good and total < 2:
            good = [c for c in fits if steps_of(c) >= 2]
        if good:
            cand = max(good)
            if cand >= 1024 or total < 2:
                tile = cand
    return tile


def _group_layers(widths, in_bytes, param_budget):
    """Split layers into consecutive groups whose resident params fit VMEM."""
    groups, cur, cur_bytes = [], [], 0
    for i in range(len(widths) - 1):
        pb = widths[i] * widths[i + 1] * in_bytes + widths[i + 1] * 4
        if cur and cur_bytes + pb > param_budget:
            groups.append(cur)
            cur, cur_bytes = [], 0
        cur.append(i)
        cur_bytes += pb
    groups.append(cur)
    return groups


def _make_group_kernel(n_layers, relu_flags, compute_dtype):
    """Fused (W @ x + b, optional ReLU) x n_layers kernel, NCL layout.

    refs = (x_ref, w0, b0, ..., w_{n-1}, b_{n-1}, o_ref)
      x_ref: (C_in, tile_L)      -- batch dim squeezed by the BlockSpec
      w_i:   (C_out_i, C_in_i)   -- compute dtype (f32 or bf16)
      b_i:   (C_out_i, 1)        -- f32, broadcast along lanes
      o_ref: (C_out_last, tile_L)
    """

    def kernel(*refs):
        x_ref, o_ref, params = refs[0], refs[-1], refs[1:-1]
        h = x_ref[...]                                      # compute dtype
        for li in range(n_layers):
            w = params[2 * li][...]
            b = params[2 * li + 1][...]                     # f32 (C_out, 1)
            acc = jnp.dot(w, h, preferred_element_type=jnp.float32) + b
            if relu_flags[li]:
                acc = jnp.maximum(acc, 0.0)
            # Keep inter-layer activations in the compute dtype (halves live
            # VMEM / pack traffic in the bf16 path); final layer stays f32
            # until the store cast.
            h = acc.astype(compute_dtype) if li < n_layers - 1 else acc
        o_ref[...] = h.astype(o_ref.dtype)

    return kernel


def _call_group(h, ws, bs, relu_flags, compute_dtype, out_dtype, tile_l,
                vmem_limit):
    n_rows, c_in, l_pad = h.shape
    c_out = ws[-1].shape[0]
    n_layers = len(ws)
    grid = (n_rows, l_pad // tile_l)

    kernel = _make_group_kernel(n_layers, relu_flags, compute_dtype)

    flops = 2 * n_rows * l_pad * sum(w.shape[0] * w.shape[1] for w in ws)
    bytes_accessed = (
        n_rows * c_in * l_pad * jnp.dtype(compute_dtype).itemsize
        + n_rows * c_out * l_pad * jnp.dtype(out_dtype).itemsize
        + sum(int(w.size) * w.dtype.itemsize for w in ws)
        + sum(int(b.size) * 4 for b in bs))
    cost = pl.CostEstimate(flops=int(flops), transcendentals=0,
                           bytes_accessed=int(bytes_accessed))

    params_flat = []
    for w, b in zip(ws, bs):
        params_flat += [w, b]

    def build(single_buffer_params):
        in_specs = [pl.BlockSpec((None, c_in, tile_l), lambda n, l: (n, 0, l))]
        for w, b in zip(ws, bs):
            if single_buffer_params:
                # Constant index_map -> resident; single-buffer to halve the
                # parameter VMEM footprint.
                in_specs.append(pl.BlockSpec(w.shape, lambda n, l: (0, 0),
                                             pipeline_mode=pl.Buffered(1)))
                in_specs.append(pl.BlockSpec(b.shape, lambda n, l: (0, 0),
                                             pipeline_mode=pl.Buffered(1)))
            else:
                in_specs.append(pl.BlockSpec(w.shape, lambda n, l: (0, 0)))
                in_specs.append(pl.BlockSpec(b.shape, lambda n, l: (0, 0)))
        out_spec = pl.BlockSpec((None, c_out, tile_l), lambda n, l: (n, 0, l))
        return pl.pallas_call(
            kernel,
            out_shape=jax.ShapeDtypeStruct((n_rows, c_out, l_pad), out_dtype),
            grid_spec=pltpu.PrefetchScalarGridSpec(
                num_scalar_prefetch=0,
                grid=grid,
                in_specs=in_specs,
                out_specs=out_spec,
            ),
            compiler_params=pltpu.CompilerParams(
                dimension_semantics=("parallel", "parallel"),
                vmem_limit_bytes=vmem_limit),
            cost_estimate=cost,
        )

    try:
        return build(True)(h, *params_flat)
    except Exception:
        # pl.Buffered(1) (single-buffered resident params) not supported by the
        # installed jax/libtpu -> fall back to default double-buffered params.
        return build(False)(h, *params_flat)


def mlp_conv_forward(x, weights, biases, *, use_bf16=False):
    """Forward pass of mlp_conv (stack of Conv1d(k=1) [+ReLU]) on NCL input.

    Args:
      x:       (N, C_in, L) array, torch Conv1d layout.
      weights: list of (C_out_i, C_in_i) arrays == torch conv.weight[:, :, 0].
      biases:  list of (C_out_i,) arrays.
      use_bf16: bf16 operands with f32 accumulation. Worth enabling on every
                TPU generation (halves HBM traffic, ~3x fewer MXU passes);
                default stays f32 to match torch numerics exactly.
    Returns:
      (N, C_out_last, L) array with x.dtype.
    """
    N, C_in, L = x.shape
    out_dtype = x.dtype
    n_layers = len(weights)
    widths = [C_in] + [w.shape[0] for w in weights]
    C_out = widths[-1]

    compute_dtype = jnp.bfloat16 if use_bf16 else x.dtype
    in_bytes = jnp.dtype(compute_dtype).itemsize

    budget, vmem_limit = _vmem_budget_and_limit()

    # Small-L relayout: merge the batch into the lane axis (one-time transpose,
    # amortized over all layers) so stores stay lane-dense instead of masked
    # sub-128 vst.msk on every layer.
    merge_batch = (L < 128) and (N > 1)
    if merge_batch:
        h = jnp.transpose(x, (1, 0, 2)).reshape(1, C_in, N * L)
        n_rows, l_cur = 1, N * L
    else:
        h = x
        n_rows, l_cur = N, L
    h = h.astype(compute_dtype)

    # Pad L only to the next multiple of 128 (never to tile_l).
    l_pad = l_cur if l_cur <= 256 else _round_up(l_cur, 128)
    if l_pad != l_cur:
        h = jnp.pad(h, ((0, 0), (0, 0), (0, l_pad - l_cur)))

    ws = [w.astype(compute_dtype) for w in weights]
    bs = [b.reshape(-1, 1).astype(jnp.float32) for b in biases]

    # Group consecutive layers so resident (single-buffered) params stay well
    # under the per-step VMEM budget; normally this is a single fused group.
    groups = _group_layers(widths, in_bytes, max(_MiB, budget // 2))

    for gi, g in enumerate(groups):
        last_group = gi == len(groups) - 1
        g_ws = [ws[i] for i in g]
        g_bs = [bs[i] for i in g]
        g_relu = tuple(i < n_layers - 1 for i in g)       # no ReLU on out layer
        g_widths = [widths[g[0]]] + [widths[i + 1] for i in g]
        g_out_dtype = out_dtype if last_group else compute_dtype
        out_bytes = jnp.dtype(g_out_dtype).itemsize
        tile_l = _choose_tile_l(n_rows, l_pad, g_widths, in_bytes, out_bytes,
                                budget)
        h = _call_group(h, g_ws, g_bs, g_relu, compute_dtype, g_out_dtype,
                        tile_l, vmem_limit)

    out = h
    if l_pad != l_cur:
        out = out[:, :, :l_cur]
    if merge_batch:
        out = jnp.transpose(out.reshape(C_out, N, L), (1, 0, 2))
    return out


def init_mlp_conv_params(key, in_channels, layer_dims):
    """Deterministic synthetic parameters matching mlp_conv.__init__ shapes."""
    weights, biases = [], []
    c_in = in_channels
    for c_out in layer_dims:
        key, kw, kb = jax.random.split(key, 3)
        # torch Conv1d weight is (out, in, 1); stored squeezed: (out, in).
        w = jax.random.normal(kw, (c_out, c_in), dtype=jnp.float32) * 0.1
        b = jax.random.normal(kb, (c_out,), dtype=jnp.float32) * 0.1
        weights.append(w)
        biases.append(b)
        c_in = c_out
    return weights, biases


def mlp_conv_reference(x, weights, biases):
    """Pure-JAX reference (correctness check), NCL layout."""
    n_layers = len(weights)
    h = x
    for li, (w, b) in enumerate(zip(weights, biases)):
        h = jnp.einsum('oc,ncl->nol', w, h) + b[None, :, None]
        if li < n_layers - 1:
            h = jnp.maximum(h, 0.0)
    return h


if __name__ == "__main__":
    key = jax.random.PRNGKey(0)
    key, kx = jax.random.split(key)

    # Small shapes consistent with the module: Conv1d input is (N, C, L).
    N, C_in, L = 2, 4, 16
    layer_dims = [32, 32, 8]  # two hidden (Conv1d+ReLU) layers + out Conv1d

    x = jax.random.normal(kx, (N, C_in, L), dtype=jnp.float32)
    weights, biases = init_mlp_conv_params(key, C_in, layer_dims)

    # Small-L path (L < 128): batch merged into the lane axis.
    out = jax.block_until_ready(mlp_conv_forward(x, weights, biases))
    ref = mlp_conv_reference(x, weights, biases)
    assert out.shape == (N, layer_dims[-1], L), out.shape
    assert jnp.allclose(out, ref, atol=1e-5, rtol=1e-5), "mismatch vs reference"

    # Tiled + 128-padded path (L > 256, not a multiple of 128).
    N2, L2 = 2, 300
    x2 = jax.random.normal(jax.random.PRNGKey(1), (N2, C_in, L2),
                           dtype=jnp.float32)
    out2 = jax.block_until_ready(mlp_conv_forward(x2, weights, biases))
    ref2 = mlp_conv_reference(x2, weights, biases)
    assert out2.shape == (N2, layer_dims[-1], L2), out2.shape
    assert jnp.allclose(out2, ref2, atol=1e-5, rtol=1e-5), "mismatch (tiled)"

    # bf16 operands / f32 accumulate path (enabled on all generations).
    out3 = jax.block_until_ready(
        mlp_conv_forward(x2, weights, biases, use_bf16=True))
    assert out3.shape == (N2, layer_dims[-1], L2), out3.shape
    assert jnp.allclose(out3, ref2, atol=1e-1, rtol=1e-1), "mismatch (bf16)"

    print("KERNEL_OK")
</pallas_src>

<mosaic_0001>
module attributes {stable_mosaic.version = 11 : i64} {
  func.func @kernel(%arg0: i32, %arg1: i32, %arg2: memref<1x4x32xf32, #tpu.memory_space<vmem>>, %arg3: memref<32x4xf32, #tpu.memory_space<vmem>>, %arg4: memref<32x1xf32, #tpu.memory_space<vmem>>, %arg5: memref<32x32xf32, #tpu.memory_space<vmem>>, %arg6: memref<32x1xf32, #tpu.memory_space<vmem>>, %arg7: memref<8x32xf32, #tpu.memory_space<vmem>>, %arg8: memref<8x1xf32, #tpu.memory_space<vmem>>, %arg9: memref<1x8x32xf32, #tpu.memory_space<vmem>>) attributes {dimension_semantics = [#tpu.dimension_semantics<parallel>, #tpu.dimension_semantics<parallel>], iteration_bounds = array<i64: 1, 1>, scalar_prefetch = 0 : i64, scratch_operands = 0 : i64, tpu.core_type = #tpu.core_type<tc>, window_params = [{transform_indices = @transform_0, window_bounds = array<i64: 1, 4, 32>}, {pipeline_mode = #tpu.pipeline_mode<synchronous>, transform_indices = @transform_1, window_bounds = array<i64: 32, 4>}, {pipeline_mode = #tpu.pipeline_mode<synchronous>, transform_indices = @transform_2, window_bounds = array<i64: 32, 1>}, {pipeline_mode = #tpu.pipeline_mode<synchronous>, transform_indices = @transform_3, window_bounds = array<i64: 32, 32>}, {pipeline_mode = #tpu.pipeline_mode<synchronous>, transform_indices = @transform_4, window_bounds = array<i64: 32, 1>}, {pipeline_mode = #tpu.pipeline_mode<synchronous>, transform_indices = @transform_5, window_bounds = array<i64: 8, 32>}, {pipeline_mode = #tpu.pipeline_mode<synchronous>, transform_indices = @transform_6, window_bounds = array<i64: 8, 1>}, {transform_indices = @transform_7, window_bounds = array<i64: 1, 8, 32>}]} {
    %c0 = arith.constant 0 : index
    %c0_0 = arith.constant 0 : index
    %c0_1 = arith.constant 0 : index
    %0 = vector.load %arg2[%c0, %c0_0, %c0_1] : memref<1x4x32xf32, #tpu.memory_space<vmem>>, vector<1x4x32xf32>
    %1 = vector.shape_cast %0 : vector<1x4x32xf32> to vector<4x32xf32>
    %c0_2 = arith.constant 0 : index
    %c0_3 = arith.constant 0 : index
    %2 = vector.load %arg3[%c0_2, %c0_3] : memref<32x4xf32, #tpu.memory_space<vmem>>, vector<32x4xf32>
    %c0_4 = arith.constant 0 : index
    %c0_5 = arith.constant 0 : index
    %3 = vector.load %arg4[%c0_4, %c0_5] : memref<32x1xf32, #tpu.memory_space<vmem>>, vector<32x1xf32>
    %cst = arith.constant dense<0.000000e+00> : vector<32x32xf32>
    %4 = tpu.matmul %2, %1, %cst {dimension_numbers = #tpu.dot_dimension_numbers<[1], [0], [0], [1], [0, 0, 1, 1], [], []>} : vector<32x4xf32>, vector<4x32xf32>, vector<32x32xf32> -> vector<32x32xf32>
    %5 = vector.broadcast %3 : vector<32x1xf32> to vector<32x32xf32>
    %6 = arith.addf %4, %5 : vector<32x32xf32>
    %cst_6 = arith.constant 0.000000e+00 : f32
    %7 = vector.broadcast %cst_6 : f32 to vector<32x32xf32>
    %8 = arith.maximumf %6, %7 : vector<32x32xf32>
    %c0_7 = arith.constant 0 : index
    %c0_8 = arith.constant 0 : index
    %9 = vector.load %arg5[%c0_7, %c0_8] : memref<32x32xf32, #tpu.memory_space<vmem>>, vector<32x32xf32>
    %c0_9 = arith.constant 0 : index
    %c0_10 = arith.constant 0 : index
    %10 = vector.load %arg6[%c0_9, %c0_10] : memref<32x1xf32, #tpu.memory_space<vmem>>, vector<32x1xf32>
    %cst_11 = arith.constant dense<0.000000e+00> : vector<32x32xf32>
    %11 = tpu.matmul %9, %8, %cst_11 {dimension_numbers = #tpu.dot_dimension_numbers<[1], [0], [0], [1], [0, 0, 1, 1], [], []>} : vector<32x32xf32>, vector<32x32xf32>, vector<32x32xf32> -> vector<32x32xf32>
    %12 = vector.broadcast %10 : vector<32x1xf32> to vector<32x32xf32>
    %13 = arith.addf %11, %12 : vector<32x32xf32>
    %cst_12 = arith.constant 0.000000e+00 : f32
    %14 = vector.broadcast %cst_12 : f32 to vector<32x32xf32>
    %15 = arith.maximumf %13, %14 : vector<32x32xf32>
    %c0_13 = arith.constant 0 : index
    %c0_14 = arith.constant 0 : index
    %16 = vector.load %arg7[%c0_13, %c0_14] : memref<8x32xf32, #tpu.memory_space<vmem>>, vector<8x32xf32>
    %c0_15 = arith.constant 0 : index
    %c0_16 = arith.constant 0 : index
    %17 = vector.load %arg8[%c0_15, %c0_16] : memref<8x1xf32, #tpu.memory_space<vmem>>, vector<8x1xf32>
    %cst_17 = arith.constant dense<0.000000e+00> : vector<8x32xf32>
    %18 = tpu.matmul %16, %15, %cst_17 {dimension_numbers = #tpu.dot_dimension_numbers<[1], [0], [0], [1], [0, 0, 1, 1], [], []>} : vector<8x32xf32>, vector<32x32xf32>, vector<8x32xf32> -> vector<8x32xf32>
    %19 = vector.broadcast %17 : vector<8x1xf32> to vector<8x32xf32>
    %20 = arith.addf %18, %19 : vector<8x32xf32>
    %c0_18 = arith.constant 0 : index
    %c0_19 = arith.constant 0 : index
    %c0_20 = arith.constant 0 : index
    %21 = vector.load %arg9[%c0_18, %c0_19, %c0_20] : memref<1x8x32xf32, #tpu.memory_space<vmem>>, vector<1x8x32xf32>
    %22 = vector.shape_cast %21 : vector<1x8x32xf32> to vector<8x32xf32>
    %23 = vector.shape_cast %20 : vector<8x32xf32> to vector<1x8x32xf32>
    tpu.vector_store %arg9[%c0_18, %c0_19, %c0_20], %23 {strides = array<i32>} : memref<1x8x32xf32, #tpu.memory_space<vmem>>, vector<1x8x32xf32>,
    return
  }
  func.func @transform_0(%arg0: i32, %arg1: i32) -> (i32, i32, i32) {
    %c0_i32 = arith.constant 0 : i32
    %c0_i32_0 = arith.constant 0 : i32
    return %arg0, %c0_i32, %arg1 : i32, i32, i32
  }
  func.func @transform_1(%arg0: i32, %arg1: i32) -> (i32, i32) {
    %c0_i32 = arith.constant 0 : i32
    %c0_i32_0 = arith.constant 0 : i32
    %c0_i32_1 = arith.constant 0 : i32
    return %c0_i32, %c0_i32_0 : i32, i32
  }
  func.func @transform_2(%arg0: i32, %arg1: i32) -> (i32, i32) {
    %c0_i32 = arith.constant 0 : i32
    %c0_i32_0 = arith.constant 0 : i32
    %c0_i32_1 = arith.constant 0 : i32
    return %c0_i32, %c0_i32_0 : i32, i32
  }
  func.func @transform_3(%arg0: i32, %arg1: i32) -> (i32, i32) {
    %c0_i32 = arith.constant 0 : i32
    %c0_i32_0 = arith.constant 0 : i32
    %c0_i32_1 = arith.constant 0 : i32
    return %c0_i32, %c0_i32_0 : i32, i32
  }
  func.func @transform_4(%arg0: i32, %arg1: i32) -> (i32, i32) {
    %c0_i32 = arith.constant 0 : i32
    %c0_i32_0 = arith.constant 0 : i32
    %c0_i32_1 = arith.constant 0 : i32
    return %c0_i32, %c0_i32_0 : i32, i32
  }
  func.func @transform_5(%arg0: i32, %arg1: i32) -> (i32, i32) {
    %c0_i32 = arith.constant 0 : i32
    %c0_i32_0 = arith.constant 0 : i32
    %c0_i32_1 = arith.constant 0 : i32
    return %c0_i32, %c0_i32_0 : i32, i32
  }
  func.func @transform_6(%arg0: i32, %arg1: i32) -> (i32, i32) {
    %c0_i32 = arith.constant 0 : i32
    %c0_i32_0 = arith.constant 0 : i32
    %c0_i32_1 = arith.constant 0 : i32
    return %c0_i32, %c0_i32_0 : i32, i32
  }
  func.func @transform_7(%arg0: i32, %arg1: i32) -> (i32, i32, i32) {
    %c0_i32 = arith.constant 0 : i32
    %c0_i32_0 = arith.constant 0 : i32
    return %arg0, %c0_i32, %arg1 : i32, i32, i32
  }
}

module attributes {stable_mosaic.version = 11 : i64} {
  func.func @kernel(%arg0: i32, %arg1: i32, %arg2: memref<1x4x32xf32, #tpu.memory_space<vmem>>, %arg3: memref<32x4xf32, #tpu.memory_space<vmem>>, %arg4: memref<32x1xf32, #tpu.memory_space<vmem>>, %arg5: memref<32x32xf32, #tpu.memory_space<vmem>>, %arg6: memref<32x1xf32, #tpu.memory_space<vmem>>, %arg7: memref<8x32xf32, #tpu.memory_space<vmem>>, %arg8: memref<8x1xf32, #tpu.memory_space<vmem>>, %arg9: memref<1x8x32xf32, #tpu.memory_space<vmem>>) attributes {dimension_semantics = [#tpu.dimension_semantics<parallel>, #tpu.dimension_semantics<parallel>], iteration_bounds = array<i64: 1, 1>, scalar_prefetch = 0 : i64, scratch_operands = 0 : i64, tpu.core_type = #tpu.core_type<tc>, window_params = [{transform_indices = @transform_0, window_bounds = array<i64: 1, 4, 32>}, {pipeline_mode = #tpu.pipeline_mode<synchronous>, transform_indices = @transform_1, window_bounds = array<i64: 32, 4>}, {pipeline_mode = #tpu.pipeline_mode<synchronous>, transform_indices = @transform_2, window_bounds = array<i64: 32, 1>}, {pipeline_mode = #tpu.pipeline_mode<synchronous>, transform_indices = @transform_3, window_bounds = array<i64: 32, 32>}, {pipeline_mode = #tpu.pipeline_mode<synchronous>, transform_indices = @transform_4, window_bounds = array<i64: 32, 1>}, {pipeline_mode = #tpu.pipeline_mode<synchronous>, transform_indices = @transform_5, window_bounds = array<i64: 8, 32>}, {pipeline_mode = #tpu.pipeline_mode<synchronous>, transform_indices = @transform_6, window_bounds = array<i64: 8, 1>}, {transform_indices = @transform_7, window_bounds = array<i64: 1, 8, 32>}]} {
    %c0 = arith.constant 0 : index
    %c0_0 = arith.constant 0 : index
    %c0_1 = arith.constant 0 : index
    %0 = vector.load %arg2[%c0, %c0_0, %c0_1] : memref<1x4x32xf32, #tpu.memory_space<vmem>>, vector<1x4x32xf32>
    %1 = vector.shape_cast %0 : vector<1x4x32xf32> to vector<4x32xf32>
    %c0_2 = arith.constant 0 : index
    %c0_3 = arith.constant 0 : index
    %2 = vector.load %arg3[%c0_2, %c0_3] : memref<32x4xf32, #tpu.memory_space<vmem>>, vector<32x4xf32>
    %c0_4 = arith.constant 0 : index
    %c0_5 = arith.constant 0 : index
    %3 = vector.load %arg4[%c0_4, %c0_5] : memref<32x1xf32, #tpu.memory_space<vmem>>, vector<32x1xf32>
    %cst = arith.constant dense<0.000000e+00> : vector<32x32xf32>
    %4 = tpu.matmul %2, %1, %cst {dimension_numbers = #tpu.dot_dimension_numbers<[1], [0], [0], [1], [0, 0, 1, 1], [], []>} : vector<32x4xf32>, vector<4x32xf32>, vector<32x32xf32> -> vector<32x32xf32>
    %5 = vector.broadcast %3 : vector<32x1xf32> to vector<32x32xf32>
    %6 = arith.addf %4, %5 : vector<32x32xf32>
    %cst_6 = arith.constant 0.000000e+00 : f32
    %7 = vector.broadcast %cst_6 : f32 to vector<32x32xf32>
    %8 = arith.maximumf %6, %7 : vector<32x32xf32>
    %c0_7 = arith.constant 0 : index
    %c0_8 = arith.constant 0 : index
    %9 = vector.load %arg5[%c0_7, %c0_8] : memref<32x32xf32, #tpu.memory_space<vmem>>, vector<32x32xf32>
    %c0_9 = arith.constant 0 : index
    %c0_10 = arith.constant 0 : index
    %10 = vector.load %arg6[%c0_9, %c0_10] : memref<32x1xf32, #tpu.memory_space<vmem>>, vector<32x1xf32>
    %cst_11 = arith.constant dense<0.000000e+00> : vector<32x32xf32>
    %11 = tpu.matmul %9, %8, %cst_11 {dimension_numbers = #tpu.dot_dimension_numbers<[1], [0], [0], [1], [0, 0, 1, 1], [], []>} : vector<32x32xf32>, vector<32x32xf32>, vector<32x32xf32> -> vector<32x32xf32>
    %12 = vector.broadcast %10 : vector<32x1xf32> to vector<32x32xf32>
    %13 = arith.addf %11, %12 : vector<32x32xf32>
    %cst_12 = arith.constant 0.000000e+00 : f32
    %14 = vector.broadcast %cst_12 : f32 to vector<32x32xf32>
    %15 = arith.maximumf %13, %14 : vector<32x32xf32>
    %c0_13 = arith.constant 0 : index
    %c0_14 = arith.constant 0 : index
    %16 = vector.load %arg7[%c0_13, %c0_14] : memref<8x32xf32, #tpu.memory_space<vmem>>, vector<8x32xf32>
    %c0_15 = arith.constant 0 : index
    %c0_16 = arith.constant 0 : index
    %17 = vector.load %arg8[%c0_15, %c0_16] : memref<8x1xf32, #tpu.memory_space<vmem>>, vector<8x1xf32>
    %cst_17 = arith.constant dense<0.000000e+00> : vector<8x32xf32>
    %18 = tpu.matmul %16, %15, %cst_17 {dimension_numbers = #tpu.dot_dimension_numbers<[1], [0], [0], [1], [0, 0, 1, 1], [], []>} : vector<8x32xf32>, vector<32x32xf32>, vector<8x32xf32> -> vector<8x32xf32>
    %19 = vector.broadcast %17 : vector<8x1xf32> to vector<8x32xf32>
    %20 = arith.addf %18, %19 : vector<8x32xf32>
    %c0_18 = arith.constant 0 : index
    %c0_19 = arith.constant 0 : index
    %c0_20 = arith.constant 0 : index
    %21 = vector.load %arg9[%c0_18, %c0_19, %c0_20] : memref<1x8x32xf32, #tpu.memory_space<vmem>>, vector<1x8x32xf32>
    %22 = vector.shape_cast %21 : vector<1x8x32xf32> to vector<8x32xf32>
    %23 = vector.shape_cast %20 : vector<8x32xf32> to vector<1x8x32xf32>
    tpu.vector_store %arg9[%c0_18, %c0_19, %c0_20], %23 {strides = array<i32>} : memref<1x8x32xf32, #tpu.memory_space<vmem>>, vector<1x8x32xf32>,
    return
  }
  func.func @transform_0(%arg0: i32, %arg1: i32) -> (i32, i32, i32) {
    %c0_i32 = arith.constant 0 : i32
    %c0_i32_0 = arith.constant 0 : i32
    return %arg0, %c0_i32, %arg1 : i32, i32, i32
  }
  func.func @transform_1(%arg0: i32, %arg1: i32) -> (i32, i32) {
    %c0_i32 = arith.constant 0 : i32
    %c0_i32_0 = arith.constant 0 : i32
    %c0_i32_1 = arith.constant 0 : i32
    return %c0_i32, %c0_i32_0 : i32, i32
  }
  func.func @transform_2(%arg0: i32, %arg1: i32) -> (i32, i32) {
    %c0_i32 = arith.constant 0 : i32
    %c0_i32_0 = arith.constant 0 : i32
    %c0_i32_1 = arith.constant 0 : i32
    return %c0_i32, %c0_i32_0 : i32, i32
  }
  func.func @transform_3(%arg0: i32, %arg1: i32) -> (i32, i32) {
    %c0_i32 = arith.constant 0 : i32
    %c0_i32_0 = arith.constant 0 : i32
    %c0_i32_1 = arith.constant 0 : i32
    return %c0_i32, %c0_i32_0 : i32, i32
  }
  func.func @transform_4(%arg0: i32, %arg1: i32) -> (i32, i32) {
    %c0_i32 = arith.constant 0 : i32
    %c0_i32_0 = arith.constant 0 : i32
    %c0_i32_1 = arith.constant 0 : i32
    return %c0_i32, %c0_i32_0 : i32, i32
  }
  func.func @transform_5(%arg0: i32, %arg1: i32) -> (i32, i32) {
    %c0_i32 = arith.constant 0 : i32
    %c0_i32_0 = arith.constant 0 : i32
    %c0_i32_1 = arith.constant 0 : i32
    return %c0_i32, %c0_i32_0 : i32, i32
  }
  func.func @transform_6(%arg0: i32, %arg1: i32) -> (i32, i32) {
    %c0_i32 = arith.constant 0 : i32
    %c0_i32_0 = arith.constant 0 : i32
    %c0_i32_1 = arith.constant 0 : i32
    return %c0_i32, %c0_i32_0 : i32, i32
  }
  func.func @transform_7(%arg0: i32, %arg1: i32) -> (i32, i32, i32) {
    %c0_i32 = arith.constant 0 : i32
    %c0_i32_0 = arith.constant 0 : i32
    return %arg0, %c0_i32, %arg1 : i32, i32, i32
  }
}

</mosaic_0001>

<llo_original>
// kernel: tpu_custom_call.1
$region0: #{tpu_custom_call.1}
  #allocation0 [shape = 'u32[]', space=smem, size = 0x4, offset = 0x4, fixed_abs, tag = 'smem constant byte address 0x4 - core index']
  #allocation1 [shape = 'u32[144,128]{1,0:T(1,128)}', space=vmem, size = 0x12000, scoped, tag = 'internal scratch']
  %s0 = inlined_call_operand.vmem [shape: f32[1,4,32], index: 0, kind: input, shape index: {}]
  %s1 = inlined_call_operand.vmem [shape: f32[32,4], index: 1, kind: input, shape index: {}]
  %s2 = inlined_call_operand.vmem [shape: f32[32,1], index: 2, kind: input, shape index: {}]
  %s3 = inlined_call_operand.vmem [shape: f32[32,32], index: 3, kind: input, shape index: {}]
  %s4 = inlined_call_operand.vmem [shape: f32[32,1], index: 4, kind: input, shape index: {}]
  %s5 = inlined_call_operand.vmem [shape: f32[8,32], index: 5, kind: input, shape index: {}]
  %s6 = inlined_call_operand.vmem [shape: f32[8,1], index: 6, kind: input, shape index: {}]
  %s7 = inlined_call_operand.hbm [shape: f32[1,8,32], index: 7, kind: output, shape index: {}]
  %s8 = sld [smem:[#allocation0]]
  $region38: #{tpu_custom_call.1} parent=0
    _
  %s10 = ssub.s32 1, %s8
  %s11 = scalar_select 0, %s10, %s8
  $region1: #{tpu_custom_call.1} parent=0
    #allocation2 [shape = 'u8[4096]{0}', space=vmem, size = 0x1000, scoped, tag = 'output window, operand 0, single buffered']
    #allocation3 [shape = 's32[1]{0}', space=sflag, size = 0x4, scoped, tag = 'scoped memory for tpu_custom_call.1']
    %12 = vsyncpa [#allocation3], 0
    // Predicated region
    $region2: #{tpu_custom_call.1} parent=1 // pred_check
      _
    $region3: #{tpu_custom_call.1} parent=1 // pred_check_branch
      %14 = sbr.rel (0) target = $region5
    $region4: #{tpu_custom_call.1} parent=1 // pred_region
      _
    $region5: #{tpu_custom_call.1} parent=1 // pred_fallthru
      _
    // Predicated region
    $region6: #{tpu_custom_call.1} parent=1 // pred_check
      _
    $region7: #{tpu_custom_call.1} parent=1 // pred_check_branch
      %16 = sbr.rel (0) target = $region9
    $region8: #{tpu_custom_call.1} parent=1 // pred_region
      _
    $region9: #{tpu_custom_call.1} parent=1 // pred_fallthru
      _
    // Predicated region
    $region10: #{tpu_custom_call.1} parent=1 // pred_check
      _
    $region11: #{tpu_custom_call.1} parent=1 // pred_check_branch
      %18 = sbr.rel (0) target = $region13
    $region12: #{tpu_custom_call.1} parent=1 // pred_region
      _
    $region13: #{tpu_custom_call.1} parent=1 // pred_fallthru
      _
    // Predicated region
    $region14: #{tpu_custom_call.1} parent=1 // pred_check
      _
    $region15: #{tpu_custom_call.1} parent=1 // pred_check_branch
      %20 = sbr.rel (0) target = $region17
    $region16: #{tpu_custom_call.1} parent=1 // pred_region
      _
    $region17: #{tpu_custom_call.1} parent=1 // pred_fallthru
      _
    // Predicated region
    $region18: #{tpu_custom_call.1} parent=1 // pred_check
      _
    $region19: #{tpu_custom_call.1} parent=1 // pred_check_branch
      %22 = sbr.rel (0) target = $region21
    $region20: #{tpu_custom_call.1} parent=1 // pred_region
      _
    $region21: #{tpu_custom_call.1} parent=1 // pred_fallthru
      _
    // Predicated region
    $region22: #{tpu_custom_call.1} parent=1 // pred_check
      _
    $region23: #{tpu_custom_call.1} parent=1 // pred_check_branch
      %24 = sbr.rel (0) target = $region25
    $region24: #{tpu_custom_call.1} parent=1 // pred_region
      _
    $region25: #{tpu_custom_call.1} parent=1 // pred_fallthru
      _
    // Predicated region
    $region26: #{tpu_custom_call.1} parent=1 // pred_check
      _
    $region27: #{tpu_custom_call.1} parent=1 // pred_check_branch
      %26 = sbr.rel (0) target = $region29
    $region28: #{tpu_custom_call.1} parent=1 // pred_region
      _
    $region29: #{tpu_custom_call.1} parent=1 // pred_fallthru
      _
    %v27 = vld [vmem:[%s0] sm:$0xf]
    %v28 = vld [vmem:[%s1] sm:$0xff]
    %v29 = vld [vmem:[%s1 + $0x8] sm:$0xff]
    %v30 = vld [vmem:[%s1 + $0x10] sm:$0xff]
    %v31 = vld [vmem:[%s1 + $0x18] sm:$0xff]
    %v32 = vld [vmem:[%s2] sm:$0xff]
    %v33 = vld [vmem:[%s2 + $0x8] sm:$0xff]
    %v34 = vld [vmem:[%s2 + $0x10] sm:$0xff]
    %v35 = vld [vmem:[%s2 + $0x18] sm:$0xff]
    %37 = vset.pattern.permute.xlu0 0
    %38 = vperm.xlu0 %37, %v32
    %v39 = vpop.permute.xlu0 %38
    %42 = vset.pattern.permute.xlu0 0
    %43 = vperm.xlu0 %42, %v33
    %v44 = vpop.permute.xlu0 %43
    %47 = vset.pattern.permute.xlu0 0
    %48 = vperm.xlu0 %47, %v34
    %v49 = vpop.permute.xlu0 %48
    %52 = vset.pattern.permute.xlu0 0
    %53 = vperm.xlu0 %52, %v35
    %v54 = vpop.permute.xlu0 %53
    %vm56 = vcmask 31744
    %v58 = vsel %vm56, %v28, 0
    %v61 = vsel %vm56, %v29, 0
    %v64 = vsel %vm56, %v30, 0
    %v67 = vsel %vm56, %v31, 0
    %vm69 = vcmask 1043456
    %v71 = vsel %vm69, %v27, 0
    %73 = vmatprep.subr.mxu0 0.0
    %74 = vmatpush1.msra.mxu0 0.0
    %75 = vmatprep.subr.mxu0 0.0
    %76 = vmatpush1.msra.mxu0 0.0
    %77 = vmatprep.subr.mxu0 0.0
    %78 = vmatpush1.msra.mxu0 0.0
    %79 = vmatprep.subr.mxu0 0.0
    %80 = vmatpush1.msra.mxu0 0.0
    %81 = vmatprep.subr.mxu0 0.0
    %82 = vmatpush1.msra.mxu0 0.0
    %83 = vmatprep.subr.mxu0 0.0
    %84 = vmatpush1.msra.mxu0 0.0
    %85 = vmatprep.subr.mxu0 0.0
    %86 = vmatpush1.msra.mxu0 0.0
    %87 = vmatprep.subr.mxu0 0.0
    %88 = vmatpush1.msra.mxu0 0.0
    %89 = vmatprep.subr.mxu0 0.0
    %90 = vmatpush1.msra.mxu0 0.0
    %91 = vmatprep.subr.mxu0 0.0
    %92 = vmatpush1.msra.mxu0 0.0
    %93 = vmatprep.subr.mxu0 0.0
    %94 = vmatpush1.msra.mxu0 0.0
    %95 = vmatprep.subr.mxu0 0.0
    %96 = vmatpush1.msra.mxu0 0.0
    %97 = vmatprep.subr.mxu0 0.0
    %98 = vmatpush1.msra.mxu0 0.0
    %99 = vmatprep.subr.mxu0 0.0
    %100 = vmatpush1.msra.mxu0 0.0
    %101 = vmatprep.subr.mxu0 0.0
    %102 = vmatpush1.msra.mxu0 0.0
    %103 = vmatprep.subr.mxu0 0.0
    %104 = vmatpush1.msra.mxu0 %v71
    %105 = vmatprep.subr.mxu0 0.0
    %106 = vmatpush2.msra.mxu0 0.0
    %107 = vmatprep.subr.mxu0 0.0
    %108 = vmatpush2.msra.mxu0 0.0
    %109 = vmatprep.subr.mxu0 0.0
    %110 = vmatpush2.msra.mxu0 0.0
    %111 = vmatprep.subr.mxu0 0.0
    %112 = vmatpush2.msra.mxu0 0.0
    %113 = vmatprep.subr.mxu0 0.0
    %114 = vmatpush2.msra.mxu0 0.0
    %115 = vmatprep.subr.mxu0 0.0
    %116 = vmatpush2.msra.mxu0 0.0
    %117 = vmatprep.subr.mxu0 0.0
    %118 = vmatpush2.msra.mxu0 0.0
    %119 = vmatprep.subr.mxu0 0.0
    %120 = vmatpush2.msra.mxu0 0.0
    %121 = vmatprep.subr.mxu0 0.0
    %122 = vmatpush2.msra.mxu0 0.0
    %123 = vmatprep.subr.mxu0 0.0
    %124 = vmatpush2.msra.mxu0 0.0
    %125 = vmatprep.subr.mxu0 0.0
    %126 = vmatpush2.msra.mxu0 0.0
    %127 = vmatprep.subr.mxu0 0.0
    %128 = vmatpush2.msra.mxu0 0.0
    %129 = vmatprep.subr.mxu0 0.0
    %130 = vmatpush2.msra.mxu0 0.0
    %131 = vmatprep.subr.mxu0 0.0
    %132 = vmatpush2.msra.mxu0 0.0
    %133 = vmatprep.subr.mxu0 0.0
    %134 = vmatpush2.msra.mxu0 0.0
    %135 = vmatprep.subr.mxu0 0.0
    %136 = vmatpush2.msra.mxu0 0.0
    %137 = vmatprep.mubr.f32.mxu0 0.0
    %138 = vmatmul.mubr.f32.gmra.mxu0 %v58
    %v139 = vpop.f32.mrf.mxu0
    %v140 = vadd.f32 %v39, %v139
    %v141 = vpop.f32.mrf.mxu0
    %142 = vmatprep.mubr.f32.mxu0 0.0
    %143 = vmatmul.mubr.f32.gmra.mxu0 %v61
    %v144 = vpop.f32.mrf.mxu0
    %v145 = vadd.f32 %v44, %v144
    %v146 = vpop.f32.mrf.mxu0
    %147 = vmatprep.mubr.f32.mxu0 0.0
    %148 = vmatmul.mubr.f32.gmra.mxu0 %v64
    %v149 = vpop.f32.mrf.mxu0
    %v150 = vadd.f32 %v49, %v149
    %v151 = vpop.f32.mrf.mxu0
    %152 = vmatprep.mubr.f32.mxu0 0.0
    %153 = vmatmul.mubr.f32.gmra.mxu0 %v67
    %v154 = vpop.f32.mrf.mxu0
    %v155 = vadd.f32 %v54, %v154
    %v156 = vpop.f32.mrf.mxu0
    %157 = vdwg.mxu0
    %v158 = vmax.f32 %v140, 0.0
    %v159 = vmax.f32 %v145, 0.0
    %v160 = vmax.f32 %v150, 0.0
    %v161 = vmax.f32 %v155, 0.0
    %v162 = vld [vmem:[%s3] sm:$0xff]
    %v163 = vld [vmem:[%s3 + $0x8] sm:$0xff]
    %v164 = vld [vmem:[%s3 + $0x10] sm:$0xff]
    %v165 = vld [vmem:[%s3 + $0x18] sm:$0xff]
    %v166 = vld [vmem:[%s4] sm:$0xff]
    %v167 = vld [vmem:[%s4 + $0x8] sm:$0xff]
    %v168 = vld [vmem:[%s4 + $0x10] sm:$0xff]
    %v169 = vld [vmem:[%s4 + $0x18] sm:$0xff]
    %171 = vset.pattern.permute.xlu0 0
    %172 = vperm.xlu0 %171, %v166
    %v173 = vpop.permute.xlu0 %172
    %176 = vset.pattern.permute.xlu0 0
    %177 = vperm.xlu0 %176, %v167
    %v178 = vpop.permute.xlu0 %177
    %181 = vset.pattern.permute.xlu0 0
    %182 = vperm.xlu0 %181, %v168
    %v183 = vpop.permute.xlu0 %182
    %186 = vset.pattern.permute.xlu0 0
    %187 = vperm.xlu0 %186, %v169
    %v188 = vpop.permute.xlu0 %187
    %vm190 = vcmask 261120
    %v192 = vsel %vm190, %v162, 0
    %v195 = vsel %vm190, %v163, 0
    %v198 = vsel %vm190, %v164, 0
    %v201 = vsel %vm190, %v165, 0
    %203 = vmatprep.subr.mxu0 0.0
    %204 = vmatpush1.msra.mxu0 0.0
    %205 = vmatprep.subr.mxu0 0.0
    %206 = vmatpush1.msra.mxu0 0.0
    %207 = vmatprep.subr.mxu0 0.0
    %208 = vmatpush1.msra.mxu0 0.0
    %209 = vmatprep.subr.mxu0 0.0
    %210 = vmatpush1.msra.mxu0 0.0
    %211 = vmatprep.subr.mxu0 0.0
    %212 = vmatpush1.msra.mxu0 0.0
    %213 = vmatprep.subr.mxu0 0.0
    %214 = vmatpush1.msra.mxu0 0.0
    %215 = vmatprep.subr.mxu0 0.0
    %216 = vmatpush1.msra.mxu0 0.0
    %217 = vmatprep.subr.mxu0 0.0
    %218 = vmatpush1.msra.mxu0 0.0
    %219 = vmatprep.subr.mxu0 0.0
    %220 = vmatpush1.msra.mxu0 0.0
    %221 = vmatprep.subr.mxu0 0.0
    %222 = vmatpush1.msra.mxu0 0.0
    %223 = vmatprep.subr.mxu0 0.0
    %224 = vmatpush1.msra.mxu0 0.0
    %225 = vmatprep.subr.mxu0 0.0
    %226 = vmatpush1.msra.mxu0 0.0
    %227 = vmatprep.subr.mxu0 0.0
    %228 = vmatpush1.msra.mxu0 %v161
    %229 = vmatprep.subr.mxu0 0.0
    %230 = vmatpush1.msra.mxu0 %v160
    %231 = vmatprep.subr.mxu0 0.0
    %232 = vmatpush1.msra.mxu0 %v159
    %233 = vmatprep.subr.mxu0 0.0
    %234 = vmatpush1.msra.mxu0 %v158
    %235 = vmatprep.subr.mxu0 0.0
    %236 = vmatpush2.msra.mxu0 0.0
    %237 = vmatprep.subr.mxu0 0.0
    %238 = vmatpush2.msra.mxu0 0.0
    %239 = vmatprep.subr.mxu0 0.0
    %240 = vmatpush2.msra.mxu0 0.0
    %241 = vmatprep.subr.mxu0 0.0
    %242 = vmatpush2.msra.mxu0 0.0
    %243 = vmatprep.subr.mxu0 0.0
    %244 = vmatpush2.msra.mxu0 0.0
    %245 = vmatprep.subr.mxu0 0.0
    %246 = vmatpush2.msra.mxu0 0.0
    %247 = vmatprep.subr.mxu0 0.0
    %248 = vmatpush2.msra.mxu0 0.0
    %249 = vmatprep.subr.mxu0 0.0
    %250 = vmatpush2.msra.mxu0 0.0
    %251 = vmatprep.subr.mxu0 0.0
    %252 = vmatpush2.msra.mxu0 0.0
    %253 = vmatprep.subr.mxu0 0.0
    %254 = vmatpush2.msra.mxu0 0.0
    %255 = vmatprep.subr.mxu0 0.0
    %256 = vmatpush2.msra.mxu0 0.0
    %257 = vmatprep.subr.mxu0 0.0
    %258 = vmatpush2.msra.mxu0 0.0
    %259 = vmatprep.subr.mxu0 0.0
    %260 = vmatpush2.msra.mxu0 0.0
    %261 = vmatprep.subr.mxu0 0.0
    %262 = vmatpush2.msra.mxu0 0.0
    %263 = vmatprep.subr.mxu0 0.0
    %264 = vmatpush2.msra.mxu0 0.0
    %265 = vmatprep.subr.mxu0 0.0
    %266 = vmatpush2.msra.mxu0 0.0
    %267 = vmatprep.mubr.f32.mxu0 0.0
    %268 = vmatmul.mubr.f32.gmra.mxu0 %v192
    %v269 = vpop.f32.mrf.mxu0
    %v270 = vadd.f32 %v173, %v269
    %v271 = vpop.f32.mrf.mxu0
    %272 = vmatprep.mubr.f32.mxu0 0.0
    %273 = vmatmul.mubr.f32.gmra.mxu0 %v195
    %v274 = vpop.f32.mrf.mxu0
    %v275 = vadd.f32 %v178, %v274
    %v276 = vpop.f32.mrf.mxu0
    %277 = vmatprep.mubr.f32.mxu0 0.0
    %278 = vmatmul.mubr.f32.gmra.mxu0 %v198
    %v279 = vpop.f32.mrf.mxu0
    %v280 = vadd.f32 %v183, %v279
    %v281 = vpop.f32.mrf.mxu0
    %282 = vmatprep.mubr.f32.mxu0 0.0
    %283 = vmatmul.mubr.f32.gmra.mxu0 %v201
    %v284 = vpop.f32.mrf.mxu0
    %v285 = vadd.f32 %v188, %v284
    %v286 = vpop.f32.mrf.mxu0
    %287 = vdwg.mxu0
    %v288 = vmax.f32 %v270, 0.0
    %v289 = vmax.f32 %v275, 0.0
    %v290 = vmax.f32 %v280, 0.0
    %v291 = vmax.f32 %v285, 0.0
    %v292 = vld [vmem:[%s5] sm:$0xff]
    %v293 = vld [vmem:[%s6] sm:$0xff]
    %295 = vset.pattern.permute.xlu0 0
    %296 = vperm.xlu0 %295, %v293
    %v297 = vpop.permute.xlu0 %296
    %v300 = vsel %vm190, %v292, 0
    %302 = vmatprep.subr.mxu0 0.0
    %303 = vmatpush1.msra.mxu0 0.0
    %304 = vmatprep.subr.mxu0 0.0
    %305 = vmatpush1.msra.mxu0 0.0
    %306 = vmatprep.subr.mxu0 0.0
    %307 = vmatpush1.msra.mxu0 0.0
    %308 = vmatprep.subr.mxu0 0.0
    %309 = vmatpush1.msra.mxu0 0.0
    %310 = vmatprep.subr.mxu0 0.0
    %311 = vmatpush1.msra.mxu0 0.0
    %312 = vmatprep.subr.mxu0 0.0
    %313 = vmatpush1.msra.mxu0 0.0
    %314 = vmatprep.subr.mxu0 0.0
    %315 = vmatpush1.msra.mxu0 0.0
    %316 = vmatprep.subr.mxu0 0.0
    %317 = vmatpush1.msra.mxu0 0.0
    %318 = vmatprep.subr.mxu0 0.0
    %319 = vmatpush1.msra.mxu0 0.0
    %320 = vmatprep.subr.mxu0 0.0
    %321 = vmatpush1.msra.mxu0 0.0
    %322 = vmatprep.subr.mxu0 0.0
    %323 = vmatpush1.msra.mxu0 0.0
    %324 = vmatprep.subr.mxu0 0.0
    %325 = vmatpush1.msra.mxu0 0.0
    %326 = vmatprep.subr.mxu0 0.0
    %327 = vmatpush1.msra.mxu0 %v291
    %328 = vmatprep.subr.mxu0 0.0
    %329 = vmatpush1.msra.mxu0 %v290
    %330 = vmatprep.subr.mxu0 0.0
    %331 = vmatpush1.msra.mxu0 %v289
    %332 = vmatprep.subr.mxu0 0.0
    %333 = vmatpush1.msra.mxu0 %v288
    %334 = vmatprep.subr.mxu0 0.0
    %335 = vmatpush2.msra.mxu0 0.0
    %336 = vmatprep.subr.mxu0 0.0
    %337 = vmatpush2.msra.mxu0 0.0
    %338 = vmatprep.subr.mxu0 0.0
    %339 = vmatpush2.msra.mxu0 0.0
    %340 = vmatprep.subr.mxu0 0.0
    %341 = vmatpush2.msra.mxu0 0.0
    %342 = vmatprep.subr.mxu0 0.0
    %343 = vmatpush2.msra.mxu0 0.0
    %344 = vmatprep.subr.mxu0 0.0
    %345 = vmatpush2.msra.mxu0 0.0
    %346 = vmatprep.subr.mxu0 0.0
    %347 = vmatpush2.msra.mxu0 0.0
    %348 = vmatprep.subr.mxu0 0.0
    %349 = vmatpush2.msra.mxu0 0.0
    %350 = vmatprep.subr.mxu0 0.0
    %351 = vmatpush2.msra.mxu0 0.0
    %352 = vmatprep.subr.mxu0 0.0
    %353 = vmatpush2.msra.mxu0 0.0
    %354 = vmatprep.subr.mxu0 0.0
    %355 = vmatpush2.msra.mxu0 0.0
    %356 = vmatprep.subr.mxu0 0.0
    %357 = vmatpush2.msra.mxu0 0.0
    %358 = vmatprep.subr.mxu0 0.0
    %359 = vmatpush2.msra.mxu0 0.0
    %360 = vmatprep.subr.mxu0 0.0
    %361 = vmatpush2.msra.mxu0 0.0
    %362 = vmatprep.subr.mxu0 0.0
    %363 = vmatpush2.msra.mxu0 0.0
    %364 = vmatprep.subr.mxu0 0.0
    %365 = vmatpush2.msra.mxu0 0.0
    %366 = vmatprep.mubr.f32.mxu0 0.0
    %367 = vmatmul.mubr.f32.gmra.mxu0 %v300
    %v368 = vpop.f32.mrf.mxu0
    %v369 = vadd.f32 %v297, %v368
    %v370 = vpop.f32.mrf.mxu0
    %371 = vdwg.mxu0
    %372 = vst.msk [vmem:[#allocation2] sm:$0xff] %vm190, %v369
    // Predicated region
    $region30: #{tpu_custom_call.1} parent=1 // pred_check
      _
    $region31: #{tpu_custom_call.1} parent=1 // pred_check_branch
      %374 = sbr.rel (0) target = $region33
    $region32: #{tpu_custom_call.1} parent=1 // pred_region
      %s376 = ssub.s32 128, 128
      %377 = vsyncadd [#allocation3], %s376
      %s379 = sshll.u32 [#allocation2], 4
      %s380 = int_to_ptr.vmem [resolvable:$true] %s379
      %382 = dma.vmem_to_hbm [thread:$0]  %s380, 128, %s7, [#allocation3]
    $region33: #{tpu_custom_call.1} parent=1 // pred_fallthru
      _
    // Predicated region
    $region34: #{tpu_custom_call.1} parent=1 // pred_check
      _
    $region35: #{tpu_custom_call.1} parent=1 // pred_check_branch
      %384 = sbr.rel (0) target = $region37
    $region36: #{tpu_custom_call.1} parent=1 // pred_region
      %385 = dma.done [#allocation3], 128
    $region37: #{tpu_custom_call.1} parent=1 // pred_fallthru
      _
    %386 = vsyncpa [#allocation3], 1

// kernel: tpu_custom_call.1
$region0: #{tpu_custom_call.1}
  #allocation0 [shape = 'u32[]', space=smem, size = 0x4, offset = 0x4, fixed_abs, tag = 'smem constant byte address 0x4 - core index']
  #allocation1 [shape = 'u32[144,128]{1,0:T(1,128)}', space=vmem, size = 0x12000, scoped, tag = 'internal scratch']
  %s0 = inlined_call_operand.vmem [shape: f32[1,4,32], index: 0, kind: input, shape index: {}]
  %s1 = inlined_call_operand.vmem [shape: f32[32,4], index: 1, kind: input, shape index: {}]
  %s2 = inlined_call_operand.vmem [shape: f32[32,1], index: 2, kind: input, shape index: {}]
  %s3 = inlined_call_operand.vmem [shape: f32[32,32], index: 3, kind: input, shape index: {}]
  %s4 = inlined_call_operand.vmem [shape: f32[32,1], index: 4, kind: input, shape index: {}]
  %s5 = inlined_call_operand.vmem [shape: f32[8,32], index: 5, kind: input, shape index: {}]
  %s6 = inlined_call_operand.vmem [shape: f32[8,1], index: 6, kind: input, shape index: {}]
  %s7 = inlined_call_operand.hbm [shape: f32[1,8,32], index: 7, kind: output, shape index: {}]
  %s8 = sld [smem:[#allocation0]]
  $region38: #{tpu_custom_call.1} parent=0
    _
  %s10 = ssub.s32 1, %s8
  %s11 = scalar_select 0, %s10, %s8
  $region1: #{tpu_custom_call.1} parent=0
    #allocation2 [shape = 'u8[4096]{0}', space=vmem, size = 0x1000, scoped, tag = 'output window, operand 0, single buffered']
    #allocation3 [shape = 's32[1]{0}', space=sflag, size = 0x4, scoped, tag = 'scoped memory for tpu_custom_call.1']
    %12 = vsyncpa [#allocation3], 0
    // Predicated region
    $region2: #{tpu_custom_call.1} parent=1 // pred_check
      _
    $region3: #{tpu_custom_call.1} parent=1 // pred_check_branch
      %14 = sbr.rel (0) target = $region5
    $region4: #{tpu_custom_call.1} parent=1 // pred_region
      _
    $region5: #{tpu_custom_call.1} parent=1 // pred_fallthru
      _
    // Predicated region
    $region6: #{tpu_custom_call.1} parent=1 // pred_check
      _
    $region7: #{tpu_custom_call.1} parent=1 // pred_check_branch
      %16 = sbr.rel (0) target = $region9
    $region8: #{tpu_custom_call.1} parent=1 // pred_region
      _
    $region9: #{tpu_custom_call.1} parent=1 // pred_fallthru
      _
    // Predicated region
    $region10: #{tpu_custom_call.1} parent=1 // pred_check
      _
    $region11: #{tpu_custom_call.1} parent=1 // pred_check_branch
      %18 = sbr.rel (0) target = $region13
    $region12: #{tpu_custom_call.1} parent=1 // pred_region
      _
    $region13: #{tpu_custom_call.1} parent=1 // pred_fallthru
      _
    // Predicated region
    $region14: #{tpu_custom_call.1} parent=1 // pred_check
      _
    $region15: #{tpu_custom_call.1} parent=1 // pred_check_branch
      %20 = sbr.rel (0) target = $region17
    $region16: #{tpu_custom_call.1} parent=1 // pred_region
      _
    $region17: #{tpu_custom_call.1} parent=1 // pred_fallthru
      _
    // Predicated region
    $region18: #{tpu_custom_call.1} parent=1 // pred_check
      _
    $region19: #{tpu_custom_call.1} parent=1 // pred_check_branch
      %22 = sbr.rel (0) target = $region21
    $region20: #{tpu_custom_call.1} parent=1 // pred_region
      _
    $region21: #{tpu_custom_call.1} parent=1 // pred_fallthru
      _
    // Predicated region
    $region22: #{tpu_custom_call.1} parent=1 // pred_check
      _
    $region23: #{tpu_custom_call.1} parent=1 // pred_check_branch
      %24 = sbr.rel (0) target = $region25
    $region24: #{tpu_custom_call.1} parent=1 // pred_region
      _
    $region25: #{tpu_custom_call.1} parent=1 // pred_fallthru
      _
    // Predicated region
    $region26: #{tpu_custom_call.1} parent=1 // pred_check
      _
    $region27: #{tpu_custom_call.1} parent=1 // pred_check_branch
      %26 = sbr.rel (0) target = $region29
    $region28: #{tpu_custom_call.1} parent=1 // pred_region
      _
    $region29: #{tpu_custom_call.1} parent=1 // pred_fallthru
      _
    %v27 = vld [vmem:[%s0] sm:$0xf]
    %v28 = vld [vmem:[%s1] sm:$0xff]
    %v29 = vld [vmem:[%s1 + $0x8] sm:$0xff]
    %v30 = vld [vmem:[%s1 + $0x10] sm:$0xff]
    %v31 = vld [vmem:[%s1 + $0x18] sm:$0xff]
    %v32 = vld [vmem:[%s2] sm:$0xff]
    %v33 = vld [vmem:[%s2 + $0x8] sm:$0xff]
    %v34 = vld [vmem:[%s2 + $0x10] sm:$0xff]
    %v35 = vld [vmem:[%s2 + $0x18] sm:$0xff]
    %37 = vset.pattern.permute.xlu0 0
    %38 = vperm.xlu0 %37, %v32
    %v39 = vpop.permute.xlu0 %38
    %42 = vset.pattern.permute.xlu0 0
    %43 = vperm.xlu0 %42, %v33
    %v44 = vpop.permute.xlu0 %43
    %47 = vset.pattern.permute.xlu0 0
    %48 = vperm.xlu0 %47, %v34
    %v49 = vpop.permute.xlu0 %48
    %52 = vset.pattern.permute.xlu0 0
    %53 = vperm.xlu0 %52, %v35
    %v54 = vpop.permute.xlu0 %53
    %vm56 = vcmask 31744
    %v58 = vsel %vm56, %v28, 0
    %v61 = vsel %vm56, %v29, 0
    %v64 = vsel %vm56, %v30, 0
    %v67 = vsel %vm56, %v31, 0
    %vm69 = vcmask 1043456
    %v71 = vsel %vm69, %v27, 0
    %73 = vmatprep.subr.mxu0 0.0
    %74 = vmatpush1.msra.mxu0 0.0
    %75 = vmatprep.subr.mxu0 0.0
    %76 = vmatpush1.msra.mxu0 0.0
    %77 = vmatprep.subr.mxu0 0.0
    %78 = vmatpush1.msra.mxu0 0.0
    %79 = vmatprep.subr.mxu0 0.0
    %80 = vmatpush1.msra.mxu0 0.0
    %81 = vmatprep.subr.mxu0 0.0
    %82 = vmatpush1.msra.mxu0 0.0
    %83 = vmatprep.subr.mxu0 0.0
    %84 = vmatpush1.msra.mxu0 0.0
    %85 = vmatprep.subr.mxu0 0.0
    %86 = vmatpush1.msra.mxu0 0.0
    %87 = vmatprep.subr.mxu0 0.0
    %88 = vmatpush1.msra.mxu0 0.0
    %89 = vmatprep.subr.mxu0 0.0
    %90 = vmatpush1.msra.mxu0 0.0
    %91 = vmatprep.subr.mxu0 0.0
    %92 = vmatpush1.msra.mxu0 0.0
    %93 = vmatprep.subr.mxu0 0.0
    %94 = vmatpush1.msra.mxu0 0.0
    %95 = vmatprep.subr.mxu0 0.0
    %96 = vmatpush1.msra.mxu0 0.0
    %97 = vmatprep.subr.mxu0 0.0
    %98 = vmatpush1.msra.mxu0 0.0
    %99 = vmatprep.subr.mxu0 0.0
    %100 = vmatpush1.msra.mxu0 0.0
    %101 = vmatprep.subr.mxu0 0.0
    %102 = vmatpush1.msra.mxu0 0.0
    %103 = vmatprep.subr.mxu0 0.0
    %104 = vmatpush1.msra.mxu0 %v71
    %105 = vmatprep.subr.mxu0 0.0
    %106 = vmatpush2.msra.mxu0 0.0
    %107 = vmatprep.subr.mxu0 0.0
    %108 = vmatpush2.msra.mxu0 0.0
    %109 = vmatprep.subr.mxu0 0.0
    %110 = vmatpush2.msra.mxu0 0.0
    %111 = vmatprep.subr.mxu0 0.0
    %112 = vmatpush2.msra.mxu0 0.0
    %113 = vmatprep.subr.mxu0 0.0
    %114 = vmatpush2.msra.mxu0 0.0
    %115 = vmatprep.subr.mxu0 0.0
    %116 = vmatpush2.msra.mxu0 0.0
    %117 = vmatprep.subr.mxu0 0.0
    %118 = vmatpush2.msra.mxu0 0.0
    %119 = vmatprep.subr.mxu0 0.0
    %120 = vmatpush2.msra.mxu0 0.0
    %121 = vmatprep.subr.mxu0 0.0
    %122 = vmatpush2.msra.mxu0 0.0
    %123 = vmatprep.subr.mxu0 0.0
    %124 = vmatpush2.msra.mxu0 0.0
    %125 = vmatprep.subr.mxu0 0.0
    %126 = vmatpush2.msra.mxu0 0.0
    %127 = vmatprep.subr.mxu0 0.0
    %128 = vmatpush2.msra.mxu0 0.0
    %129 = vmatprep.subr.mxu0 0.0
    %130 = vmatpush2.msra.mxu0 0.0
    %131 = vmatprep.subr.mxu0 0.0
    %132 = vmatpush2.msra.mxu0 0.0
    %133 = vmatprep.subr.mxu0 0.0
    %134 = vmatpush2.msra.mxu0 0.0
    %135 = vmatprep.subr.mxu0 0.0
    %136 = vmatpush2.msra.mxu0 0.0
    %137 = vmatprep.mubr.f32.mxu0 0.0
    %138 = vmatmul.mubr.f32.gmra.mxu0 %v58
    %v139 = vpop.f32.mrf.mxu0
    %v140 = vadd.f32 %v39, %v139
    %v141 = vpop.f32.mrf.mxu0
    %142 = vmatprep.mubr.f32.mxu0 0.0
    %143 = vmatmul.mubr.f32.gmra.mxu0 %v61
    %v144 = vpop.f32.mrf.mxu0
    %v145 = vadd.f32 %v44, %v144
    %v146 = vpop.f32.mrf.mxu0
    %147 = vmatprep.mubr.f32.mxu0 0.0
    %148 = vmatmul.mubr.f32.gmra.mxu0 %v64
    %v149 = vpop.f32.mrf.mxu0
    %v150 = vadd.f32 %v49, %v149
    %v151 = vpop.f32.mrf.mxu0
    %152 = vmatprep.mubr.f32.mxu0 0.0
    %153 = vmatmul.mubr.f32.gmra.mxu0 %v67
    %v154 = vpop.f32.mrf.mxu0
    %v155 = vadd.f32 %v54, %v154
    %v156 = vpop.f32.mrf.mxu0
    %157 = vdwg.mxu0
    %v158 = vmax.f32 %v140, 0.0
    %v159 = vmax.f32 %v145, 0.0
    %v160 = vmax.f32 %v150, 0.0
    %v161 = vmax.f32 %v155, 0.0
    %v162 = vld [vmem:[%s3] sm:$0xff]
    %v163 = vld [vmem:[%s3 + $0x8] sm:$0xff]
    %v164 = vld [vmem:[%s3 + $0x10] sm:$0xff]
    %v165 = vld [vmem:[%s3 + $0x18] sm:$0xff]
    %v166 = vld [vmem:[%s4] sm:$0xff]
    %v167 = vld [vmem:[%s4 + $0x8] sm:$0xff]
    %v168 = vld [vmem:[%s4 + $0x10] sm:$0xff]
    %v169 = vld [vmem:[%s4 + $0x18] sm:$0xff]
    %171 = vset.pattern.permute.xlu0 0
    %172 = vperm.xlu0 %171, %v166
    %v173 = vpop.permute.xlu0 %172
    %176 = vset.pattern.permute.xlu0 0
    %177 = vperm.xlu0 %176, %v167
    %v178 = vpop.permute.xlu0 %177
    %181 = vset.pattern.permute.xlu0 0
    %182 = vperm.xlu0 %181, %v168
    %v183 = vpop.permute.xlu0 %182
    %186 = vset.pattern.permute.xlu0 0
    %187 = vperm.xlu0 %186, %v169
    %v188 = vpop.permute.xlu0 %187
    %vm190 = vcmask 261120
    %v192 = vsel %vm190, %v162, 0
    %v195 = vsel %vm190, %v163, 0
    %v198 = vsel %vm190, %v164, 0
    %v201 = vsel %vm190, %v165, 0
    %203 = vmatprep.subr.mxu0 0.0
    %204 = vmatpush1.msra.mxu0 0.0
    %205 = vmatprep.subr.mxu0 0.0
    %206 = vmatpush1.msra.mxu0 0.0
    %207 = vmatprep.subr.mxu0 0.0
    %208 = vmatpush1.msra.mxu0 0.0
    %209 = vmatprep.subr.mxu0 0.0
    %210 = vmatpush1.msra.mxu0 0.0
    %211 = vmatprep.subr.mxu0 0.0
    %212 = vmatpush1.msra.mxu0 0.0
    %213 = vmatprep.subr.mxu0 0.0
    %214 = vmatpush1.msra.mxu0 0.0
    %215 = vmatprep.subr.mxu0 0.0
    %216 = vmatpush1.msra.mxu0 0.0
    %217 = vmatprep.subr.mxu0 0.0
    %218 = vmatpush1.msra.mxu0 0.0
    %219 = vmatprep.subr.mxu0 0.0
    %220 = vmatpush1.msra.mxu0 0.0
    %221 = vmatprep.subr.mxu0 0.0
    %222 = vmatpush1.msra.mxu0 0.0
    %223 = vmatprep.subr.mxu0 0.0
    %224 = vmatpush1.msra.mxu0 0.0
    %225 = vmatprep.subr.mxu0 0.0
    %226 = vmatpush1.msra.mxu0 0.0
    %227 = vmatprep.subr.mxu0 0.0
    %228 = vmatpush1.msra.mxu0 %v161
    %229 = vmatprep.subr.mxu0 0.0
    %230 = vmatpush1.msra.mxu0 %v160
    %231 = vmatprep.subr.mxu0 0.0
    %232 = vmatpush1.msra.mxu0 %v159
    %233 = vmatprep.subr.mxu0 0.0
    %234 = vmatpush1.msra.mxu0 %v158
    %235 = vmatprep.subr.mxu0 0.0
    %236 = vmatpush2.msra.mxu0 0.0
    %237 = vmatprep.subr.mxu0 0.0
    %238 = vmatpush2.msra.mxu0 0.0
    %239 = vmatprep.subr.mxu0 0.0
    %240 = vmatpush2.msra.mxu0 0.0
    %241 = vmatprep.subr.mxu0 0.0
    %242 = vmatpush2.msra.mxu0 0.0
    %243 = vmatprep.subr.mxu0 0.0
    %244 = vmatpush2.msra.mxu0 0.0
    %245 = vmatprep.subr.mxu0 0.0
    %246 = vmatpush2.msra.mxu0 0.0
    %247 = vmatprep.subr.mxu0 0.0
    %248 = vmatpush2.msra.mxu0 0.0
    %249 = vmatprep.subr.mxu0 0.0
    %250 = vmatpush2.msra.mxu0 0.0
    %251 = vmatprep.subr.mxu0 0.0
    %252 = vmatpush2.msra.mxu0 0.0
    %253 = vmatprep.subr.mxu0 0.0
    %254 = vmatpush2.msra.mxu0 0.0
    %255 = vmatprep.subr.mxu0 0.0
    %256 = vmatpush2.msra.mxu0 0.0
    %257 = vmatprep.subr.mxu0 0.0
    %258 = vmatpush2.msra.mxu0 0.0
    %259 = vmatprep.subr.mxu0 0.0
    %260 = vmatpush2.msra.mxu0 0.0
    %261 = vmatprep.subr.mxu0 0.0
    %262 = vmatpush2.msra.mxu0 0.0
    %263 = vmatprep.subr.mxu0 0.0
    %264 = vmatpush2.msra.mxu0 0.0
    %265 = vmatprep.subr.mxu0 0.0
    %266 = vmatpush2.msra.mxu0 0.0
    %267 = vmatprep.mubr.f32.mxu0 0.0
    %268 = vmatmul.mubr.f32.gmra.mxu0 %v192
    %v269 = vpop.f32.mrf.mxu0
    %v270 = vadd.f32 %v173, %v269
    %v271 = vpop.f32.mrf.mxu0
    %272 = vmatprep.mubr.f32.mxu0 0.0
    %273 = vmatmul.mubr.f32.gmra.mxu0 %v195
    %v274 = vpop.f32.mrf.mxu0
    %v275 = vadd.f32 %v178, %v274
    %v276 = vpop.f32.mrf.mxu0
    %277 = vmatprep.mubr.f32.mxu0 0.0
    %278 = vmatmul.mubr.f32.gmra.mxu0 %v198
    %v279 = vpop.f32.mrf.mxu0
    %v280 = vadd.f32 %v183, %v279
    %v281 = vpop.f32.mrf.mxu0
    %282 = vmatprep.mubr.f32.mxu0 0.0
    %283 = vmatmul.mubr.f32.gmra.mxu0 %v201
    %v284 = vpop.f32.mrf.mxu0
    %v285 = vadd.f32 %v188, %v284
    %v286 = vpop.f32.mrf.mxu0
    %287 = vdwg.mxu0
    %v288 = vmax.f32 %v270, 0.0
    %v289 = vmax.f32 %v275, 0.0
    %v290 = vmax.f32 %v280, 0.0
    %v291 = vmax.f32 %v285, 0.0
    %v292 = vld [vmem:[%s5] sm:$0xff]
    %v293 = vld [vmem:[%s6] sm:$0xff]
    %295 = vset.pattern.permute.xlu0 0
    %296 = vperm.xlu0 %295, %v293
    %v297 = vpop.permute.xlu0 %296
    %v300 = vsel %vm190, %v292, 0
    %302 = vmatprep.subr.mxu0 0.0
    %303 = vmatpush1.msra.mxu0 0.0
    %304 = vmatprep.subr.mxu0 0.0
    %305 = vmatpush1.msra.mxu0 0.0
    %306 = vmatprep.subr.mxu0 0.0
    %307 = vmatpush1.msra.mxu0 0.0
    %308 = vmatprep.subr.mxu0 0.0
    %309 = vmatpush1.msra.mxu0 0.0
    %310 = vmatprep.subr.mxu0 0.0
    %311 = vmatpush1.msra.mxu0 0.0
    %312 = vmatprep.subr.mxu0 0.0
    %313 = vmatpush1.msra.mxu0 0.0
    %314 = vmatprep.subr.mxu0 0.0
    %315 = vmatpush1.msra.mxu0 0.0
    %316 = vmatprep.subr.mxu0 0.0
    %317 = vmatpush1.msra.mxu0 0.0
    %318 = vmatprep.subr.mxu0 0.0
    %319 = vmatpush1.msra.mxu0 0.0
    %320 = vmatprep.subr.mxu0 0.0
    %321 = vmatpush1.msra.mxu0 0.0
    %322 = vmatprep.subr.mxu0 0.0
    %323 = vmatpush1.msra.mxu0 0.0
    %324 = vmatprep.subr.mxu0 0.0
    %325 = vmatpush1.msra.mxu0 0.0
    %326 = vmatprep.subr.mxu0 0.0
    %327 = vmatpush1.msra.mxu0 %v291
    %328 = vmatprep.subr.mxu0 0.0
    %329 = vmatpush1.msra.mxu0 %v290
    %330 = vmatprep.subr.mxu0 0.0
    %331 = vmatpush1.msra.mxu0 %v289
    %332 = vmatprep.subr.mxu0 0.0
    %333 = vmatpush1.msra.mxu0 %v288
    %334 = vmatprep.subr.mxu0 0.0
    %335 = vmatpush2.msra.mxu0 0.0
    %336 = vmatprep.subr.mxu0 0.0
    %337 = vmatpush2.msra.mxu0 0.0
    %338 = vmatprep.subr.mxu0 0.0
    %339 = vmatpush2.msra.mxu0 0.0
    %340 = vmatprep.subr.mxu0 0.0
    %341 = vmatpush2.msra.mxu0 0.0
    %342 = vmatprep.subr.mxu0 0.0
    %343 = vmatpush2.msra.mxu0 0.0
    %344 = vmatprep.subr.mxu0 0.0
    %345 = vmatpush2.msra.mxu0 0.0
    %346 = vmatprep.subr.mxu0 0.0
    %347 = vmatpush2.msra.mxu0 0.0
    %348 = vmatprep.subr.mxu0 0.0
    %349 = vmatpush2.msra.mxu0 0.0
    %350 = vmatprep.subr.mxu0 0.0
    %351 = vmatpush2.msra.mxu0 0.0
    %352 = vmatprep.subr.mxu0 0.0
    %353 = vmatpush2.msra.mxu0 0.0
    %354 = vmatprep.subr.mxu0 0.0
    %355 = vmatpush2.msra.mxu0 0.0
    %356 = vmatprep.subr.mxu0 0.0
    %357 = vmatpush2.msra.mxu0 0.0
    %358 = vmatprep.subr.mxu0 0.0
    %359 = vmatpush2.msra.mxu0 0.0
    %360 = vmatprep.subr.mxu0 0.0
    %361 = vmatpush2.msra.mxu0 0.0
    %362 = vmatprep.subr.mxu0 0.0
    %363 = vmatpush2.msra.mxu0 0.0
    %364 = vmatprep.subr.mxu0 0.0
    %365 = vmatpush2.msra.mxu0 0.0
    %366 = vmatprep.mubr.f32.mxu0 0.0
    %367 = vmatmul.mubr.f32.gmra.mxu0 %v300
    %v368 = vpop.f32.mrf.mxu0
    %v369 = vadd.f32 %v297, %v368
    %v370 = vpop.f32.mrf.mxu0
    %371 = vdwg.mxu0
    %372 = vst.msk [vmem:[#allocation2] sm:$0xff] %vm190, %v369
    // Predicated region
    $region30: #{tpu_custom_call.1} parent=1 // pred_check
      _
    $region31: #{tpu_custom_call.1} parent=1 // pred_check_branch
      %374 = sbr.rel (0) target = $region33
    $region32: #{tpu_custom_call.1} parent=1 // pred_region
      %s376 = ssub.s32 128, 128
      %377 = vsyncadd [#allocation3], %s376
      %s379 = sshll.u32 [#allocation2], 4
      %s380 = int_to_ptr.vmem [resolvable:$true] %s379
      %382 = dma.vmem_to_hbm [thread:$0]  %s380, 128, %s7, [#allocation3]
    $region33: #{tpu_custom_call.1} parent=1 // pred_fallthru
      _
    // Predicated region
    $region34: #{tpu_custom_call.1} parent=1 // pred_check
      _
    $region35: #{tpu_custom_call.1} parent=1 // pred_check_branch
      %384 = sbr.rel (0) target = $region37
    $region36: #{tpu_custom_call.1} parent=1 // pred_region
      %385 = dma.done [#allocation3], 128
    $region37: #{tpu_custom_call.1} parent=1 // pred_fallthru
      _
    %386 = vsyncpa [#allocation3], 1

</llo_original>
